<compile_context>
chip_gen: v5e
topology: v5e:2x2
jax: 0.10.0
libtpu: 0.0.40
codegen_flags: <defaults>
</compile_context>

<pallas_src>
import jax
import jax.numpy as jnp
from jax.experimental import pallas as pl
from jax.experimental.pallas import tpu as pltpu


def _round_up(x, m):
    return (x + m - 1) // m * m


def qnetwork_kernel(x_ref, w1_ref, w2_ref, w3_ref, b_ref, o_ref):
    hidden = w1_ref.shape[1]
    out_w = w3_ref.shape[1]
    bias = b_ref[...]                       # (3, bias_w) f32, resident in VMEM

    # fc1 + ReLU  (bf16 MXU matmul, f32 accumulation / elementwise)
    h1 = jnp.dot(x_ref[...], w1_ref[...], preferred_element_type=jnp.float32)
    h1 = jnp.maximum(h1 + bias[0:1, :hidden], 0.0)

    # fc2 + ReLU
    h2 = jnp.dot(h1.astype(w2_ref.dtype), w2_ref[...],
                 preferred_element_type=jnp.float32)
    h2 = jnp.maximum(h2 + bias[1:2, :hidden], 0.0)

    # fc3 (no activation), lane-dense (padded) output
    out = jnp.dot(h2.astype(w3_ref.dtype), w3_ref[...],
                  preferred_element_type=jnp.float32)
    out = out + bias[2:3, :out_w]
    o_ref[...] = out.astype(o_ref.dtype)


def qnetwork_forward(x, w1, b1, w2, b2, w3, b3, *,
                     tile_b=256, mxu_dtype=jnp.bfloat16):
    """x: [B, input_dim]; w_i: [in_i, out_i] (transposed vs. PyTorch); b_i: [out_i].
    Returns [B, output_dim] in x.dtype."""
    B, input_dim = x.shape
    hidden = w1.shape[1]
    output_dim = w3.shape[1]
    out_dtype = x.dtype

    # Batch tile: big enough to amortize per-step overhead, multiple of 16
    # (bf16 sublane packing); small batches collapse to a single tile.
    tile_b = min(tile_b, _round_up(B, 16))
    b_pad = _round_up(B, tile_b)
    out_pad = _round_up(output_dim, 128)        # lane-dense output slab
    bias_w = max(hidden, out_pad)

    # Pad batch and cast matmul operands to bf16 (weights zero-padded on the
    # output columns so the extra lanes stay exactly zero).
    xp = x if b_pad == B else jnp.pad(x, ((0, b_pad - B), (0, 0)))
    xp = xp.astype(mxu_dtype)
    w1c = w1.astype(mxu_dtype)
    w2c = w2.astype(mxu_dtype)
    w3c = jnp.pad(w3, ((0, 0), (0, out_pad - output_dim))).astype(mxu_dtype)

    # Pack the three biases into one f32 operand (fewer tiny DMA descriptors).
    bias = jnp.zeros((3, bias_w), jnp.float32)
    bias = bias.at[0, :hidden].set(b1.reshape(-1).astype(jnp.float32))
    bias = bias.at[1, :hidden].set(b2.reshape(-1).astype(jnp.float32))
    bias = bias.at[2, :output_dim].set(b3.reshape(-1).astype(jnp.float32))

    grid = (b_pad // tile_b,)

    out = pl.pallas_call(
        qnetwork_kernel,
        out_shape=jax.ShapeDtypeStruct((b_pad, out_pad), out_dtype),
        grid_spec=pl.GridSpec(
            grid=grid,
            in_specs=[
                pl.BlockSpec((tile_b, input_dim), lambda i: (i, 0)),  # x tile moves
                pl.BlockSpec((input_dim, hidden), lambda i: (0, 0)),  # weights stay
                pl.BlockSpec((hidden, hidden),    lambda i: (0, 0)),
                pl.BlockSpec((hidden, out_pad),   lambda i: (0, 0)),
                pl.BlockSpec((3, bias_w),         lambda i: (0, 0)),  # packed biases
            ],
            out_specs=pl.BlockSpec((tile_b, out_pad), lambda i: (i, 0)),
        ),
        compiler_params=pltpu.CompilerParams(
            dimension_semantics=("parallel",)),   # batch axis: megacore-shardable
    )(xp, w1c, w2c, w3c, bias)

    return out[:B, :output_dim]


def init_linear_params(key, in_dim, out_dim):
    """PyTorch nn.Linear default init, weight returned transposed to [in, out]."""
    kw, kb = jax.random.split(key)
    bound = 1.0 / jnp.sqrt(jnp.float32(in_dim))
    w = jax.random.uniform(kw, (in_dim, out_dim), jnp.float32, -bound, bound)
    b = jax.random.uniform(kb, (out_dim,), jnp.float32, -bound, bound)
    return w, b


def qnetwork_ref(x, w1, b1, w2, b2, w3, b3):
    h1 = jnp.maximum(x @ w1 + b1[None, :], 0.0)
    h2 = jnp.maximum(h1 @ w2 + b2[None, :], 0.0)
    return h2 @ w3 + b3[None, :]


if __name__ == "__main__":
    batch = 8
    input_dim = 32     # small state vector
    hidden = 128       # fixed by the module
    output_dim = 4     # small discrete action space

    key = jax.random.PRNGKey(0)
    kx, k1, k2, k3 = jax.random.split(key, 4)

    x = jax.random.normal(kx, (batch, input_dim), jnp.float32)
    w1, b1 = init_linear_params(k1, input_dim, hidden)
    w2, b2 = init_linear_params(k2, hidden, hidden)
    w3, b3 = init_linear_params(k3, hidden, output_dim)

    out = qnetwork_forward(x, w1, b1, w2, b2, w3, b3)
    out = jax.block_until_ready(out)

    ref = qnetwork_ref(x, w1, b1, w2, b2, w3, b3)
    assert out.shape == (batch, output_dim)
    # bf16 matmul inputs (f32 accumulation) -> loose tolerance vs the pure-f32 reference.
    assert jnp.allclose(out, ref, atol=5e-2, rtol=5e-2), "mismatch vs reference"

    print("KERNEL_OK")
</pallas_src>

<mosaic_0001>
module attributes {stable_mosaic.version = 11 : i64} {
  func.func @qnetwork_kernel(%arg0: i32, %arg1: memref<16x32xbf16, #tpu.memory_space<vmem>>, %arg2: memref<32x128xbf16, #tpu.memory_space<vmem>>, %arg3: memref<128x128xbf16, #tpu.memory_space<vmem>>, %arg4: memref<128x128xbf16, #tpu.memory_space<vmem>>, %arg5: memref<3x128xf32, #tpu.memory_space<vmem>>, %arg6: memref<16x128xf32, #tpu.memory_space<vmem>>) attributes {dimension_semantics = [#tpu.dimension_semantics<parallel>], iteration_bounds = array<i64: 1>, scalar_prefetch = 0 : i64, scratch_operands = 0 : i64, tpu.core_type = #tpu.core_type<tc>, window_params = [{transform_indices = @transform_0, window_bounds = array<i64: 16, 32>}, {pipeline_mode = #tpu.pipeline_mode<synchronous>, transform_indices = @transform_1, window_bounds = array<i64: 32, 128>}, {pipeline_mode = #tpu.pipeline_mode<synchronous>, transform_indices = @transform_2, window_bounds = array<i64: 128, 128>}, {pipeline_mode = #tpu.pipeline_mode<synchronous>, transform_indices = @transform_3, window_bounds = array<i64: 128, 128>}, {pipeline_mode = #tpu.pipeline_mode<synchronous>, transform_indices = @transform_4, window_bounds = array<i64: 3, 128>}, {transform_indices = @transform_5, window_bounds = array<i64: 16, 128>}]} {
    %c0 = arith.constant 0 : index
    %c0_0 = arith.constant 0 : index
    %0 = vector.load %arg5[%c0, %c0_0] : memref<3x128xf32, #tpu.memory_space<vmem>>, vector<3x128xf32>
    %c0_1 = arith.constant 0 : index
    %c0_2 = arith.constant 0 : index
    %1 = vector.load %arg1[%c0_1, %c0_2] : memref<16x32xbf16, #tpu.memory_space<vmem>>, vector<16x32xbf16>
    %c0_3 = arith.constant 0 : index
    %c0_4 = arith.constant 0 : index
    %2 = vector.load %arg2[%c0_3, %c0_4] : memref<32x128xbf16, #tpu.memory_space<vmem>>, vector<32x128xbf16>
    %cst = arith.constant dense<0.000000e+00> : vector<16x128xf32>
    %3 = tpu.matmul %1, %2, %cst {dimension_numbers = #tpu.dot_dimension_numbers<[1], [0], [0], [1], [0, 0, 1, 1], [], []>} : vector<16x32xbf16>, vector<32x128xbf16>, vector<16x128xf32> -> vector<16x128xf32>
    %4 = vector.extract_strided_slice %0 {offsets = [0, 0], sizes = [1, 128], strides = [1, 1]} : vector<3x128xf32> to vector<1x128xf32>
    %5 = vector.broadcast %4 : vector<1x128xf32> to vector<16x128xf32>
    %6 = arith.addf %3, %5 : vector<16x128xf32>
    %cst_5 = arith.constant 0.000000e+00 : f32
    %7 = vector.broadcast %cst_5 : f32 to vector<16x128xf32>
    %8 = arith.maximumf %6, %7 : vector<16x128xf32>
    %9 = arith.truncf %8 : vector<16x128xf32> to vector<16x128xbf16>
    %c0_6 = arith.constant 0 : index
    %c0_7 = arith.constant 0 : index
    %10 = vector.load %arg3[%c0_6, %c0_7] : memref<128x128xbf16, #tpu.memory_space<vmem>>, vector<128x128xbf16>
    %cst_8 = arith.constant dense<0.000000e+00> : vector<16x128xf32>
    %11 = tpu.matmul %9, %10, %cst_8 {dimension_numbers = #tpu.dot_dimension_numbers<[1], [0], [0], [1], [0, 0, 1, 1], [], []>} : vector<16x128xbf16>, vector<128x128xbf16>, vector<16x128xf32> -> vector<16x128xf32>
    %12 = vector.extract_strided_slice %0 {offsets = [1, 0], sizes = [1, 128], strides = [1, 1]} : vector<3x128xf32> to vector<1x128xf32>
    %13 = vector.broadcast %12 : vector<1x128xf32> to vector<16x128xf32>
    %14 = arith.addf %11, %13 : vector<16x128xf32>
    %cst_9 = arith.constant 0.000000e+00 : f32
    %15 = vector.broadcast %cst_9 : f32 to vector<16x128xf32>
    %16 = arith.maximumf %14, %15 : vector<16x128xf32>
    %17 = arith.truncf %16 : vector<16x128xf32> to vector<16x128xbf16>
    %c0_10 = arith.constant 0 : index
    %c0_11 = arith.constant 0 : index
    %18 = vector.load %arg4[%c0_10, %c0_11] : memref<128x128xbf16, #tpu.memory_space<vmem>>, vector<128x128xbf16>
    %cst_12 = arith.constant dense<0.000000e+00> : vector<16x128xf32>
    %19 = tpu.matmul %17, %18, %cst_12 {dimension_numbers = #tpu.dot_dimension_numbers<[1], [0], [0], [1], [0, 0, 1, 1], [], []>} : vector<16x128xbf16>, vector<128x128xbf16>, vector<16x128xf32> -> vector<16x128xf32>
    %20 = vector.extract_strided_slice %0 {offsets = [2, 0], sizes = [1, 128], strides = [1, 1]} : vector<3x128xf32> to vector<1x128xf32>
    %21 = vector.broadcast %20 : vector<1x128xf32> to vector<16x128xf32>
    %22 = arith.addf %19, %21 : vector<16x128xf32>
    %c0_13 = arith.constant 0 : index
    %c0_14 = arith.constant 0 : index
    %23 = vector.load %arg6[%c0_13, %c0_14] : memref<16x128xf32, #tpu.memory_space<vmem>>, vector<16x128xf32>
    tpu.vector_store %arg6[%c0_13, %c0_14], %22 {strides = array<i32>} : memref<16x128xf32, #tpu.memory_space<vmem>>, vector<16x128xf32>,
    return
  }
  func.func @transform_0(%arg0: i32) -> (i32, i32) {
    %c0_i32 = arith.constant 0 : i32
    %c0_i32_0 = arith.constant 0 : i32
    return %arg0, %c0_i32 : i32, i32
  }
  func.func @transform_1(%arg0: i32) -> (i32, i32) {
    %c0_i32 = arith.constant 0 : i32
    %c0_i32_0 = arith.constant 0 : i32
    %c0_i32_1 = arith.constant 0 : i32
    return %c0_i32, %c0_i32_0 : i32, i32
  }
  func.func @transform_2(%arg0: i32) -> (i32, i32) {
    %c0_i32 = arith.constant 0 : i32
    %c0_i32_0 = arith.constant 0 : i32
    %c0_i32_1 = arith.constant 0 : i32
    return %c0_i32, %c0_i32_0 : i32, i32
  }
  func.func @transform_3(%arg0: i32) -> (i32, i32) {
    %c0_i32 = arith.constant 0 : i32
    %c0_i32_0 = arith.constant 0 : i32
    %c0_i32_1 = arith.constant 0 : i32
    return %c0_i32, %c0_i32_0 : i32, i32
  }
  func.func @transform_4(%arg0: i32) -> (i32, i32) {
    %c0_i32 = arith.constant 0 : i32
    %c0_i32_0 = arith.constant 0 : i32
    %c0_i32_1 = arith.constant 0 : i32
    return %c0_i32, %c0_i32_0 : i32, i32
  }
  func.func @transform_5(%arg0: i32) -> (i32, i32) {
    %c0_i32 = arith.constant 0 : i32
    %c0_i32_0 = arith.constant 0 : i32
    return %arg0, %c0_i32 : i32, i32
  }
}

</mosaic_0001>

<llo_original>
// kernel: tpu_custom_call.1
$region0: #{tpu_custom_call.1}
  #allocation0 [shape = 'u32[]', space=smem, size = 0x4, offset = 0x4, fixed_abs, tag = 'smem constant byte address 0x4 - core index']
  #allocation1 [shape = 'u32[72,128]{1,0:T(1,128)}', space=vmem, size = 0x9000, scoped, tag = 'internal scratch']
  %s0 = inlined_call_operand.hbm [shape: bf16[16,32], index: 0, kind: input, shape index: {}]
  %s1 = inlined_call_operand.hbm [shape: bf16[32,128], index: 1, kind: input, shape index: {}]
  %s2 = inlined_call_operand.hbm [shape: bf16[128,128], index: 2, kind: input, shape index: {}]
  %s3 = inlined_call_operand.hbm [shape: bf16[128,128], index: 3, kind: input, shape index: {}]
  %s4 = inlined_call_operand.hbm [shape: f32[3,128], index: 4, kind: input, shape index: {}]
  %s5 = inlined_call_operand.hbm [shape: f32[16,128], index: 5, kind: output, shape index: {}]
  %s6 = sld [smem:[#allocation0]]
  $region50: #{tpu_custom_call.1} parent=0
    _
  %s8 = ssub.s32 1, %s6
  %s9 = scalar_select 0, %s8, %s6
  $region1: #{tpu_custom_call.1} parent=0
    #allocation2 [shape = 'u8[4096]{0}', space=vmem, size = 0x1000, scoped, tag = 'input window, operand 0, single buffered']
    #allocation3 [shape = 's32[1]{0}', space=sflag, size = 0x4, scoped, tag = 'scoped memory for tpu_custom_call.1']
    #allocation4 [shape = 's32[1]{0}', space=sflag, size = 0x4, scoped, tag = 'scoped memory for tpu_custom_call.1']
    #allocation5 [shape = 'u8[8192]{0}', space=vmem, size = 0x2000, scoped, tag = 'input window, operand 1, single buffered']
    #allocation6 [shape = 's32[1]{0}', space=sflag, size = 0x4, scoped, tag = 'scoped memory for tpu_custom_call.1']
    #allocation7 [shape = 'u8[32768]{0}', space=vmem, size = 0x8000, scoped, tag = 'input window, operand 2, single buffered']
    #allocation8 [shape = 'u8[32768]{0}', space=vmem, size = 0x8000, scoped, tag = 'input window, operand 3, single buffered']
    #allocation9 [shape = 's32[1]{0}', space=sflag, size = 0x4, scoped, tag = 'scoped memory for tpu_custom_call.1']
    #allocation10 [shape = 'u8[2048]{0}', space=vmem, size = 0x800, scoped, tag = 'input window, operand 4, single buffered']
    #allocation11 [shape = 'u8[8192]{0}', space=vmem, size = 0x2000, scoped, tag = 'output window, operand 0, single buffered']
    %10 = vsyncpa [#allocation3], 0
    %11 = vsyncpa [#allocation6], 0
    %12 = vsyncpa [#allocation9], 0
    %13 = vsyncpa [#allocation4], 0
    // Predicated region
    $region2: #{tpu_custom_call.1} parent=1 // pred_check
      _
    $region3: #{tpu_custom_call.1} parent=1 // pred_check_branch
      %15 = sbr.rel (0) target = $region5
    $region4: #{tpu_custom_call.1} parent=1 // pred_region
      %17 = vsyncadd [#allocation3], 0
      %s18 = sshll.u32 %s0, 4
      %s19 = int_to_ptr.hbm [resolvable:$true] %s18
      %s20 = sshll.u32 [#allocation2], 4
      %s21 = int_to_ptr.vmem [resolvable:$true] %s20
      %26 = dma.hbm_to_vmem [thread:$0]  %s19, 128, %s21, [#allocation3], 64, 64, 4
    $region5: #{tpu_custom_call.1} parent=1 // pred_fallthru
      _
    // Predicated region
    $region6: #{tpu_custom_call.1} parent=1 // pred_check
      _
    $region7: #{tpu_custom_call.1} parent=1 // pred_check_branch
      %28 = sbr.rel (0) target = $region9
    $region8: #{tpu_custom_call.1} parent=1 // pred_region
      %30 = vsyncadd [#allocation6], 0
      %s31 = sshll.u32 %s1, 4
      %s32 = int_to_ptr.hbm [resolvable:$true] %s31
      %s33 = sshll.u32 [#allocation5], 4
      %s34 = int_to_ptr.vmem [resolvable:$true] %s33
      %39 = dma.hbm_to_vmem [thread:$0]  %s32, 256, %s34, [#allocation6], 64, 64, 4
    $region9: #{tpu_custom_call.1} parent=1 // pred_fallthru
      _
    // Predicated region
    $region10: #{tpu_custom_call.1} parent=1 // pred_check
      _
    $region11: #{tpu_custom_call.1} parent=1 // pred_check_branch
      %41 = sbr.rel (0) target = $region13
    $region12: #{tpu_custom_call.1} parent=1 // pred_region
      %43 = vsyncadd [#allocation6], 0
      %s44 = sshll.u32 %s2, 4
      %s45 = int_to_ptr.hbm [resolvable:$true] %s44
      %s46 = sshll.u32 [#allocation7], 4
      %s47 = int_to_ptr.vmem [resolvable:$true] %s46
      %52 = dma.hbm_to_vmem [thread:$0]  %s45, 1024, %s47, [#allocation6], 64, 64, 4
    $region13: #{tpu_custom_call.1} parent=1 // pred_fallthru
      _
    // Predicated region
    $region14: #{tpu_custom_call.1} parent=1 // pred_check
      _
    $region15: #{tpu_custom_call.1} parent=1 // pred_check_branch
      %54 = sbr.rel (0) target = $region17
    $region16: #{tpu_custom_call.1} parent=1 // pred_region
      %56 = vsyncadd [#allocation9], 0
      %s57 = sshll.u32 %s3, 4
      %s58 = int_to_ptr.hbm [resolvable:$true] %s57
      %s59 = sshll.u32 [#allocation8], 4
      %s60 = int_to_ptr.vmem [resolvable:$true] %s59
      %65 = dma.hbm_to_vmem [thread:$0]  %s58, 1024, %s60, [#allocation9], 64, 64, 4
    $region17: #{tpu_custom_call.1} parent=1 // pred_fallthru
      _
    // Predicated region
    $region18: #{tpu_custom_call.1} parent=1 // pred_check
      _
    $region19: #{tpu_custom_call.1} parent=1 // pred_check_branch
      %67 = sbr.rel (0) target = $region21
    $region20: #{tpu_custom_call.1} parent=1 // pred_region
      %69 = vsyncadd [#allocation9], 0
      %s71 = sshll.u32 %s4, 4
      %s72 = int_to_ptr.hbm [resolvable:$true] %s71
      %s73 = sshll.u32 [#allocation10], 4
      %s74 = int_to_ptr.vmem [resolvable:$true] %s73
      %76 = dma.hbm_to_vmem [thread:$0]  %s72, 64, %s74, [#allocation9]
    $region21: #{tpu_custom_call.1} parent=1 // pred_fallthru
      _
    // Predicated region
    $region22: #{tpu_custom_call.1} parent=1 // pred_check
      _
    $region23: #{tpu_custom_call.1} parent=1 // pred_check_branch
      %78 = sbr.rel (0) target = $region25
    $region24: #{tpu_custom_call.1} parent=1 // pred_region
      %80 = dma.done [#allocation3], 128
    $region25: #{tpu_custom_call.1} parent=1 // pred_fallthru
      _
    // Predicated region
    $region26: #{tpu_custom_call.1} parent=1 // pred_check
      _
    $region27: #{tpu_custom_call.1} parent=1 // pred_check_branch
      %82 = sbr.rel (0) target = $region29
    $region28: #{tpu_custom_call.1} parent=1 // pred_region
      %84 = dma.done [#allocation6], 256
    $region29: #{tpu_custom_call.1} parent=1 // pred_fallthru
      _
    // Predicated region
    $region30: #{tpu_custom_call.1} parent=1 // pred_check
      _
    $region31: #{tpu_custom_call.1} parent=1 // pred_check_branch
      %86 = sbr.rel (0) target = $region33
    $region32: #{tpu_custom_call.1} parent=1 // pred_region
      %88 = dma.done [#allocation6], 1024
    $region33: #{tpu_custom_call.1} parent=1 // pred_fallthru
      _
    // Predicated region
    $region34: #{tpu_custom_call.1} parent=1 // pred_check
      _
    $region35: #{tpu_custom_call.1} parent=1 // pred_check_branch
      %90 = sbr.rel (0) target = $region37
    $region36: #{tpu_custom_call.1} parent=1 // pred_region
      %92 = dma.done [#allocation9], 1024
    $region37: #{tpu_custom_call.1} parent=1 // pred_fallthru
      _
    // Predicated region
    $region38: #{tpu_custom_call.1} parent=1 // pred_check
      _
    $region39: #{tpu_custom_call.1} parent=1 // pred_check_branch
      %94 = sbr.rel (0) target = $region41
    $region40: #{tpu_custom_call.1} parent=1 // pred_region
      %96 = dma.done [#allocation9], 64
    $region41: #{tpu_custom_call.1} parent=1 // pred_fallthru
      _
    %v98 = vld [vmem:[#allocation10] sm:$0x7]
    %v99 = vld [vmem:[#allocation2] sm:$0xf]
    %v100 = vld [vmem:[#allocation2 + $0x4] sm:$0xf]
    %v101 = vld [vmem:[#allocation5] sm:$0xf]
    %v102 = vld [vmem:[#allocation5 + $0x4] sm:$0xf]
    %v103 = vld [vmem:[#allocation5 + $0x8] sm:$0xf]
    %v104 = vld [vmem:[#allocation5 + $0xc] sm:$0xf]
    %v105 = vperm.slane %v98, 0
    %v108 = vunpack.c.l.b16 %v99
    %v109 = vunpack.c.l.b16 %v100
    %v110 = vpack.c.b16 %v109, %v108
    %v115 = vunpack.c.l.b16 %v101
    %v116 = vunpack.c.l.b16 %v102
    %v117 = vunpack.c.l.b16 %v103
    %v118 = vunpack.c.l.b16 %v104
    %v119 = vpack.c.b16 %v116, %v115
    %v120 = vpack.c.b16 %v118, %v117
    %vm123 = vcmask 261120
    %v125 = vsel %vm123, %v110, 0
    %127 = vmatpush.bf16.msra.mxu0 0
    %128 = vmatpush.bf16.msra.mxu0 0
    %129 = vmatpush.bf16.msra.mxu0 0
    %130 = vmatpush.bf16.msra.mxu0 0
    %131 = vmatpush.bf16.msra.mxu0 0
    %132 = vmatpush.bf16.msra.mxu0 0
    %133 = vmatpush.bf16.msra.mxu0 %v120
    %134 = vmatpush.bf16.msra.mxu0 %v119
    %135 = vmatmul.bf16.gmra.mxu0 %v125
    %v136 = vpop.f32.mrf.mxu0
    %v137 = vadd.f32 %v105, %v136
    %v138 = vpop.f32.mrf.mxu0
    %v139 = vadd.f32 %v105, %v138
    %140 = vdwg.mxu0
    %v141 = vmax.f32 %v137, 0.0
    %v142 = vmax.f32 %v139, 0.0
    %v143 = vpack.c.bf16 %v142, %v141
    %v144 = vld [vmem:[#allocation7] sm:$0xf]
    %v145 = vld [vmem:[#allocation7 + $0x4] sm:$0xf]
    %v146 = vld [vmem:[#allocation7 + $0x8] sm:$0xf]
    %v147 = vld [vmem:[#allocation7 + $0xc] sm:$0xf]
    %v148 = vld [vmem:[#allocation7 + $0x10] sm:$0xf]
    %v149 = vld [vmem:[#allocation7 + $0x14] sm:$0xf]
    %v150 = vld [vmem:[#allocation7 + $0x18] sm:$0xf]
    %v151 = vld [vmem:[#allocation7 + $0x1c] sm:$0xf]
    %v152 = vld [vmem:[#allocation7 + $0x20] sm:$0xf]
    %v153 = vld [vmem:[#allocation7 + $0x24] sm:$0xf]
    %v154 = vld [vmem:[#allocation7 + $0x28] sm:$0xf]
    %v155 = vld [vmem:[#allocation7 + $0x2c] sm:$0xf]
    %v156 = vld [vmem:[#allocation7 + $0x30] sm:$0xf]
    %v157 = vld [vmem:[#allocation7 + $0x34] sm:$0xf]
    %v158 = vld [vmem:[#allocation7 + $0x38] sm:$0xf]
    %v159 = vld [vmem:[#allocation7 + $0x3c] sm:$0xf]
    %v160 = vperm.slane %v98, 1
    %v177 = vunpack.c.l.b16 %v144
    %v178 = vunpack.c.l.b16 %v145
    %v179 = vunpack.c.l.b16 %v146
    %v180 = vunpack.c.l.b16 %v147
    %v181 = vunpack.c.l.b16 %v148
    %v182 = vunpack.c.l.b16 %v149
    %v183 = vunpack.c.l.b16 %v150
    %v184 = vunpack.c.l.b16 %v151
    %v185 = vunpack.c.l.b16 %v152
    %v186 = vunpack.c.l.b16 %v153
    %v187 = vunpack.c.l.b16 %v154
    %v188 = vunpack.c.l.b16 %v155
    %v189 = vunpack.c.l.b16 %v156
    %v190 = vunpack.c.l.b16 %v157
    %v191 = vunpack.c.l.b16 %v158
    %v192 = vunpack.c.l.b16 %v159
    %v193 = vpack.c.b16 %v178, %v177
    %v194 = vpack.c.b16 %v180, %v179
    %v195 = vpack.c.b16 %v182, %v181
    %v196 = vpack.c.b16 %v184, %v183
    %v197 = vpack.c.b16 %v186, %v185
    %v198 = vpack.c.b16 %v188, %v187
    %v199 = vpack.c.b16 %v190, %v189
    %v200 = vpack.c.b16 %v192, %v191
    %209 = vmatpush.bf16.msra.mxu0 %v200
    %210 = vmatpush.bf16.msra.mxu0 %v199
    %211 = vmatpush.bf16.msra.mxu0 %v198
    %212 = vmatpush.bf16.msra.mxu0 %v197
    %213 = vmatpush.bf16.msra.mxu0 %v196
    %214 = vmatpush.bf16.msra.mxu0 %v195
    %215 = vmatpush.bf16.msra.mxu0 %v194
    %216 = vmatpush.bf16.msra.mxu0 %v193
    %217 = vmatmul.bf16.gmra.mxu0 %v143
    %v218 = vpop.f32.mrf.mxu0
    %v219 = vadd.f32 %v160, %v218
    %v220 = vpop.f32.mrf.mxu0
    %v221 = vadd.f32 %v160, %v220
    %222 = vdwg.mxu0
    %v223 = vmax.f32 %v219, 0.0
    %v224 = vmax.f32 %v221, 0.0
    %v225 = vpack.c.bf16 %v224, %v223
    %v226 = vld [vmem:[#allocation8] sm:$0xf]
    %v227 = vld [vmem:[#allocation8 + $0x4] sm:$0xf]
    %v228 = vld [vmem:[#allocation8 + $0x8] sm:$0xf]
    %v229 = vld [vmem:[#allocation8 + $0xc] sm:$0xf]
    %v230 = vld [vmem:[#allocation8 + $0x10] sm:$0xf]
    %v231 = vld [vmem:[#allocation8 + $0x14] sm:$0xf]
    %v232 = vld [vmem:[#allocation8 + $0x18] sm:$0xf]
    %v233 = vld [vmem:[#allocation8 + $0x1c] sm:$0xf]
    %v234 = vld [vmem:[#allocation8 + $0x20] sm:$0xf]
    %v235 = vld [vmem:[#allocation8 + $0x24] sm:$0xf]
    %v236 = vld [vmem:[#allocation8 + $0x28] sm:$0xf]
    %v237 = vld [vmem:[#allocation8 + $0x2c] sm:$0xf]
    %v238 = vld [vmem:[#allocation8 + $0x30] sm:$0xf]
    %v239 = vld [vmem:[#allocation8 + $0x34] sm:$0xf]
    %v240 = vld [vmem:[#allocation8 + $0x38] sm:$0xf]
    %v241 = vld [vmem:[#allocation8 + $0x3c] sm:$0xf]
    %v242 = vperm.slane %v98, 2
    %v259 = vunpack.c.l.b16 %v226
    %v260 = vunpack.c.l.b16 %v227
    %v261 = vunpack.c.l.b16 %v228
    %v262 = vunpack.c.l.b16 %v229
    %v263 = vunpack.c.l.b16 %v230
    %v264 = vunpack.c.l.b16 %v231
    %v265 = vunpack.c.l.b16 %v232
    %v266 = vunpack.c.l.b16 %v233
    %v267 = vunpack.c.l.b16 %v234
    %v268 = vunpack.c.l.b16 %v235
    %v269 = vunpack.c.l.b16 %v236
    %v270 = vunpack.c.l.b16 %v237
    %v271 = vunpack.c.l.b16 %v238
    %v272 = vunpack.c.l.b16 %v239
    %v273 = vunpack.c.l.b16 %v240
    %v274 = vunpack.c.l.b16 %v241
    %v275 = vpack.c.b16 %v260, %v259
    %v276 = vpack.c.b16 %v262, %v261
    %v277 = vpack.c.b16 %v264, %v263
    %v278 = vpack.c.b16 %v266, %v265
    %v279 = vpack.c.b16 %v268, %v267
    %v280 = vpack.c.b16 %v270, %v269
    %v281 = vpack.c.b16 %v272, %v271
    %v282 = vpack.c.b16 %v274, %v273
    %291 = vmatpush.bf16.msra.mxu0 %v282
    %292 = vmatpush.bf16.msra.mxu0 %v281
    %293 = vmatpush.bf16.msra.mxu0 %v280
    %294 = vmatpush.bf16.msra.mxu0 %v279
    %295 = vmatpush.bf16.msra.mxu0 %v278
    %296 = vmatpush.bf16.msra.mxu0 %v277
    %297 = vmatpush.bf16.msra.mxu0 %v276
    %298 = vmatpush.bf16.msra.mxu0 %v275
    %299 = vmatmul.bf16.gmra.mxu0 %v225
    %v300 = vpop.f32.mrf.mxu0
    %v301 = vadd.f32 %v242, %v300
    %v302 = vpop.f32.mrf.mxu0
    %v303 = vadd.f32 %v242, %v302
    %304 = vdwg.mxu0
    %305 = vst [vmem:[#allocation11] sm:$0xff] %v301
    %306 = vst [vmem:[#allocation11 + $0x8] sm:$0xff] %v303
    // Predicated region
    $region42: #{tpu_custom_call.1} parent=1 // pred_check
      _
    $region43: #{tpu_custom_call.1} parent=1 // pred_check_branch
      %308 = sbr.rel (0) target = $region45
    $region44: #{tpu_custom_call.1} parent=1 // pred_region
      %310 = vsyncadd [#allocation4], 0
      %s311 = sshll.u32 [#allocation11], 4
      %s312 = int_to_ptr.vmem [resolvable:$true] %s311
      %s313 = sshll.u32 %s5, 4
      %s314 = int_to_ptr.hbm [resolvable:$true] %s313
      %319 = dma.vmem_to_hbm [thread:$0]  %s312, 256, %s314, [#allocation4], 128, 128, 8
    $region45: #{tpu_custom_call.1} parent=1 // pred_fallthru
      _
    // Predicated region
    $region46: #{tpu_custom_call.1} parent=1 // pred_check
      _
    $region47: #{tpu_custom_call.1} parent=1 // pred_check_branch
      %321 = sbr.rel (0) target = $region49
    $region48: #{tpu_custom_call.1} parent=1 // pred_region
      %323 = dma.done [#allocation4], 256
    $region49: #{tpu_custom_call.1} parent=1 // pred_fallthru
      _
    %324 = vsyncpa [#allocation3], 1
    %325 = vsyncpa [#allocation6], 1
    %326 = vsyncpa [#allocation9], 1
    %327 = vsyncpa [#allocation4], 1

</llo_original>
